<compile_context>
chip_gen: v6e
topology: v6e:2x2x1
jax: 0.10.0
libtpu: 0.0.40
codegen_flags: <defaults>
</compile_context>

<pallas_src>
import jax
import jax.numpy as jnp
from jax import lax
from jax.experimental import pallas as pl
from jax.experimental.pallas import tpu as pltpu


# ---------------------------------------------------------------------------
# Kernels
# ---------------------------------------------------------------------------

_TRANS_B_DIMS = (((1,), (1,)), ((), ()))  # contract x[-1] with w[-1]


def _linear_kernel_single(x_ref, w_ref, b_ref, o_ref):
    """Whole problem in one VMEM block: y = x @ w.T + b (w in PyTorch layout)."""
    x = x_ref[...]                       # (B, K)
    w = w_ref[...]                       # (N, K)   -- NOT pre-transposed
    b = b_ref[...]                       # (1, N)
    acc = lax.dot_general(x, w, _TRANS_B_DIMS, preferred_element_type=jnp.float32)
    o_ref[...] = (acc + b).astype(o_ref.dtype)


def _linear_kernel_tiled(x_ref, w_ref, b_ref, o_ref, acc_ref):
    """Tiled matmul: grid = (M_tiles, N_tiles, K_tiles), K is the reduction axis."""
    k = pl.program_id(2)

    @pl.when(k == 0)
    def _():
        acc_ref[...] = jnp.zeros_like(acc_ref)

    acc_ref[...] += lax.dot_general(
        x_ref[...], w_ref[...], _TRANS_B_DIMS, preferred_element_type=jnp.float32
    )

    @pl.when(k == pl.num_programs(2) - 1)
    def _():
        # Bias added exactly once, in the K epilogue.
        o_ref[...] = (acc_ref[...] + b_ref[...]).astype(o_ref.dtype)


# ---------------------------------------------------------------------------
# Wrapper
# ---------------------------------------------------------------------------

def _pick_tile(dim, candidates):
    for c in candidates:
        if dim % c == 0:
            return c
    return None


def _round_up(x, m):
    return ((x + m - 1) // m) * m


def _linear_forward_2d(x, weight, b2d):
    batch, input_dim = x.shape
    output_dim = weight.shape[0]
    itemsize = jnp.dtype(x.dtype).itemsize

    cost = pl.CostEstimate(
        flops=2 * batch * output_dim * input_dim,
        transcendentals=0,
        bytes_accessed=(x.size + weight.size + b2d.size + batch * output_dim)
        * itemsize,
    )
    out_shape = jax.ShapeDtypeStruct((batch, output_dim), x.dtype)

    # Tile selection: N/K tiles must be 128-aligned (lane axis) and divide the
    # array exactly (K padding would pollute the reduction, N padding would
    # force masked stores). The M tile only needs 8-alignment; a partial
    # boundary block on M is fine (out-of-range rows are dropped on store).
    tm_candidates = (512, 256, 128, 64, 32, 16, 8)
    tm = _pick_tile(batch, tm_candidates)
    if tm is None:
        padded_m = max(_round_up(batch, 8), 8)
        tm = next((c for c in tm_candidates if c <= padded_m), 8)
    tn = _pick_tile(output_dim, (512, 256, 128))
    tk = _pick_tile(input_dim, (512, 256, 128))

    grid_m = pl.cdiv(batch, tm)
    use_tiled = (
        tn is not None
        and tk is not None
        and grid_m * (output_dim // tn) * (input_dim // tk) > 1
    )

    if not use_tiled:
        # Launch-overhead-bound regime: a single full-array block is optimal.
        # NOTE: output lane width < 128 here means a masked store; pad/fuse
        # output heads to >=128 lanes at the model level if this ever matters.
        return pl.pallas_call(
            _linear_kernel_single,
            out_shape=out_shape,
            grid=(1,),
            in_specs=[
                pl.BlockSpec((batch, input_dim), lambda i: (0, 0)),
                pl.BlockSpec((output_dim, input_dim), lambda i: (0, 0)),
                pl.BlockSpec((1, output_dim), lambda i: (0, 0)),
            ],
            out_specs=pl.BlockSpec((batch, output_dim), lambda i: (0, 0)),
            compiler_params=pltpu.CompilerParams(
                dimension_semantics=("arbitrary",)
            ),
            cost_estimate=cost,
        )(x, weight, b2d)

    # Tiled path for shapes that actually benefit from pipelining.
    grid = (grid_m, output_dim // tn, input_dim // tk)

    # VMEM budget: inputs/outputs are double-buffered; accumulator is f32.
    # Budget against v7x (64 MiB physical / 32 MiB default scoped), with headroom.
    vmem_needed = 2 * (tm * tk + tn * tk + tm * tn + tn) * itemsize + tm * tn * 4
    vmem_limit = int(min(max(4 * vmem_needed, 16 << 20), 48 << 20))

    return pl.pallas_call(
        _linear_kernel_tiled,
        out_shape=out_shape,
        grid=grid,
        in_specs=[
            pl.BlockSpec((tm, tk), lambda i, j, k: (i, k)),   # x     [M, K]
            pl.BlockSpec((tn, tk), lambda i, j, k: (j, k)),   # W     [N, K]
            pl.BlockSpec((1, tn), lambda i, j, k: (0, j)),    # bias  [1, N]
        ],
        out_specs=pl.BlockSpec((tm, tn), lambda i, j, k: (i, j)),
        scratch_shapes=[pltpu.VMEM((tm, tn), jnp.float32)],
        compiler_params=pltpu.CompilerParams(
            dimension_semantics=("parallel", "parallel", "arbitrary"),
            vmem_limit_bytes=vmem_limit,
        ),
        cost_estimate=cost,
    )(x, weight, b2d)


def linear_forward(x, weight, bias):
    """y = x @ weight.T + bias, matching torch.nn.Linear semantics.

    x:      [..., input_dim]          (leading dims flattened like nn.Linear)
    weight: [output_dim, input_dim]   (PyTorch convention, passed as-is)
    bias:   [output_dim]
    """
    output_dim, k_w = weight.shape
    assert x.shape[-1] == k_w, "x last dim must equal weight's input_dim"
    b2d = bias.reshape(1, output_dim)  # keep bias 2-D for TPU layout

    lead_shape = x.shape[:-1]
    x2d = x.reshape(-1, k_w) if x.ndim != 2 else x
    y2d = _linear_forward_2d(x2d, weight, b2d)
    return y2d if x.ndim == 2 else y2d.reshape(*lead_shape, output_dim)


# ---------------------------------------------------------------------------
# Self-test
# ---------------------------------------------------------------------------

def _make_params(key, batch, input_dim, output_dim):
    kx, kw, kb = jax.random.split(key, 3)
    x = jax.random.normal(kx, (batch, input_dim), dtype=jnp.float32)
    bound = 1.0 / jnp.sqrt(jnp.float32(input_dim))
    weight = jax.random.uniform(
        kw, (output_dim, input_dim), minval=-bound, maxval=bound, dtype=jnp.float32
    )
    bias = jax.random.uniform(
        kb, (output_dim,), minval=-bound, maxval=bound, dtype=jnp.float32
    )
    return x, weight, bias


if __name__ == "__main__":
    key = jax.random.PRNGKey(0)
    k_small, k_big, k_rag = jax.random.split(key, 3)

    # 1) Small shapes implied by the module (single-block, overhead-bound path).
    batch, input_dim, output_dim = 8, 32, 16
    x, weight, bias = _make_params(k_small, batch, input_dim, output_dim)
    y = linear_forward(x, weight, bias)
    jax.block_until_ready(y)
    y_ref = x @ weight.T + bias
    assert jnp.allclose(y, y_ref, atol=1e-5, rtol=1e-5), "small-path mismatch"

    # 2) Exercise the tiled path (M/N/K grid, K accumulation + bias epilogue).
    batch, input_dim, output_dim = 256, 1024, 384
    x, weight, bias = _make_params(k_big, batch, input_dim, output_dim)
    y = linear_forward(x, weight, bias)
    jax.block_until_ready(y)
    y_ref = x @ weight.T + bias
    assert jnp.allclose(y, y_ref, atol=1e-4, rtol=1e-4), "tiled-path mismatch"

    # 3) Non-divisible batch (partial boundary block on M) through the tiled path.
    batch, input_dim, output_dim = 200, 512, 256
    x, weight, bias = _make_params(k_rag, batch, input_dim, output_dim)
    y = linear_forward(x, weight, bias)
    jax.block_until_ready(y)
    y_ref = x @ weight.T + bias
    assert jnp.allclose(y, y_ref, atol=1e-4, rtol=1e-4), "ragged-M mismatch"

    # TODO(synk): gradient_norm() is a backward-pass utility on parameter
    # gradients; it has no forward-pass Pallas equivalent and is not translated.
    print("KERNEL_OK")
</pallas_src>

<mosaic_0001>
module attributes {stable_mosaic.version = 11 : i64} {
  func.func @_linear_kernel_single(%arg0: i32, %arg1: memref<8x32xf32, #tpu.memory_space<vmem>>, %arg2: memref<16x32xf32, #tpu.memory_space<vmem>>, %arg3: memref<1x16xf32, #tpu.memory_space<vmem>>, %arg4: memref<8x16xf32, #tpu.memory_space<vmem>>) attributes {dimension_semantics = [#tpu.dimension_semantics<arbitrary>], iteration_bounds = array<i64: 1>, scalar_prefetch = 0 : i64, scratch_operands = 0 : i64, tpu.core_type = #tpu.core_type<tc>, window_params = [{pipeline_mode = #tpu.pipeline_mode<synchronous>, transform_indices = @transform_0, window_bounds = array<i64: 8, 32>}, {pipeline_mode = #tpu.pipeline_mode<synchronous>, transform_indices = @transform_1, window_bounds = array<i64: 16, 32>}, {pipeline_mode = #tpu.pipeline_mode<synchronous>, transform_indices = @transform_2, window_bounds = array<i64: 1, 16>}, {pipeline_mode = #tpu.pipeline_mode<synchronous>, transform_indices = @transform_3, window_bounds = array<i64: 8, 16>}]} {
    %c0 = arith.constant 0 : index
    %c0_0 = arith.constant 0 : index
    %0 = vector.load %arg1[%c0, %c0_0] : memref<8x32xf32, #tpu.memory_space<vmem>>, vector<8x32xf32>
    %c0_1 = arith.constant 0 : index
    %c0_2 = arith.constant 0 : index
    %1 = vector.load %arg2[%c0_1, %c0_2] : memref<16x32xf32, #tpu.memory_space<vmem>>, vector<16x32xf32>
    %c0_3 = arith.constant 0 : index
    %c0_4 = arith.constant 0 : index
    %2 = vector.load %arg3[%c0_3, %c0_4] : memref<1x16xf32, #tpu.memory_space<vmem>>, vector<1x16xf32>
    %cst = arith.constant dense<0.000000e+00> : vector<8x16xf32>
    %3 = tpu.matmul %0, %1, %cst {dimension_numbers = #tpu.dot_dimension_numbers<[1], [1], [0], [0], [0, 0, 1, 0], [], []>} : vector<8x32xf32>, vector<16x32xf32>, vector<8x16xf32> -> vector<8x16xf32>
    %4 = vector.broadcast %2 : vector<1x16xf32> to vector<8x16xf32>
    %5 = arith.addf %3, %4 : vector<8x16xf32>
    %c0_5 = arith.constant 0 : index
    %c0_6 = arith.constant 0 : index
    %6 = vector.load %arg4[%c0_5, %c0_6] : memref<8x16xf32, #tpu.memory_space<vmem>>, vector<8x16xf32>
    tpu.vector_store %arg4[%c0_5, %c0_6], %5 {strides = array<i32>} : memref<8x16xf32, #tpu.memory_space<vmem>>, vector<8x16xf32>,
    return
  }
  func.func @transform_0(%arg0: i32) -> (i32, i32) {
    %c0_i32 = arith.constant 0 : i32
    %c0_i32_0 = arith.constant 0 : i32
    %c0_i32_1 = arith.constant 0 : i32
    return %c0_i32, %c0_i32_0 : i32, i32
  }
  func.func @transform_1(%arg0: i32) -> (i32, i32) {
    %c0_i32 = arith.constant 0 : i32
    %c0_i32_0 = arith.constant 0 : i32
    %c0_i32_1 = arith.constant 0 : i32
    return %c0_i32, %c0_i32_0 : i32, i32
  }
  func.func @transform_2(%arg0: i32) -> (i32, i32) {
    %c0_i32 = arith.constant 0 : i32
    %c0_i32_0 = arith.constant 0 : i32
    %c0_i32_1 = arith.constant 0 : i32
    return %c0_i32, %c0_i32_0 : i32, i32
  }
  func.func @transform_3(%arg0: i32) -> (i32, i32) {
    %c0_i32 = arith.constant 0 : i32
    %c0_i32_0 = arith.constant 0 : i32
    %c0_i32_1 = arith.constant 0 : i32
    return %c0_i32, %c0_i32_0 : i32, i32
  }
}

</mosaic_0001>

<llo_original>
// kernel: tpu_custom_call.1
$region0: #{tpu_custom_call.1}
  #allocation0 [shape = 'u32[]', space=smem, size = 0x4, offset = 0x4, fixed_abs, tag = 'smem constant byte address 0x4 - core index']
  #allocation1 [shape = 'u32[144,128]{1,0:T(1,128)}', space=vmem, size = 0x12000, scoped, tag = 'internal scratch']
  %s0 = inlined_call_operand.hbm [shape: f32[8,32], index: 0, kind: input, shape index: {}]
  %s1 = inlined_call_operand.hbm [shape: f32[16,32], index: 1, kind: input, shape index: {}]
  %s2 = inlined_call_operand.vmem [shape: f32[1,16], index: 2, kind: input, shape index: {}]
  %s3 = inlined_call_operand.hbm [shape: f32[8,16], index: 3, kind: output, shape index: {}]
  %s4 = sld [smem:[#allocation0]]
  $region30: #{tpu_custom_call.1} parent=0
    _
  %s6 = ssub.s32 1, %s4
  %s7 = scalar_select 0, %s6, %s4
  $region1: #{tpu_custom_call.1} parent=0
    #allocation2 [shape = 'u8[4096]{0}', space=vmem, size = 0x1000, scoped, tag = 'input window, operand 0, single buffered']
    #allocation3 [shape = 's32[1]{0}', space=sflag, size = 0x4, scoped, tag = 'scoped memory for tpu_custom_call.1']
    #allocation4 [shape = 's32[1]{0}', space=sflag, size = 0x4, scoped, tag = 'scoped memory for tpu_custom_call.1']
    #allocation5 [shape = 'u8[8192]{0}', space=vmem, size = 0x2000, scoped, tag = 'input window, operand 1, single buffered']
    #allocation6 [shape = 's32[1]{0}', space=sflag, size = 0x4, scoped, tag = 'scoped memory for tpu_custom_call.1']
    #allocation7 [shape = 'u8[4096]{0}', space=vmem, size = 0x1000, scoped, tag = 'output window, operand 0, single buffered']
    %8 = vsyncpa [#allocation3], 0
    %9 = vsyncpa [#allocation6], 0
    %10 = vsyncpa [#allocation4], 0
    // Predicated region
    $region2: #{tpu_custom_call.1} parent=1 // pred_check
      _
    $region3: #{tpu_custom_call.1} parent=1 // pred_check_branch
      %12 = sbr.rel (0) target = $region5
    $region4: #{tpu_custom_call.1} parent=1 // pred_region
      %s14 = ssub.s32 128, 128
      %15 = vsyncadd [#allocation3], %s14
      %s17 = sshll.u32 [#allocation2], 4
      %s18 = int_to_ptr.vmem [resolvable:$true] %s17
      %20 = dma.hbm_to_vmem [thread:$0]  %s0, 128, %s18, [#allocation3]
    $region5: #{tpu_custom_call.1} parent=1 // pred_fallthru
      _
    // Predicated region
    $region6: #{tpu_custom_call.1} parent=1 // pred_check
      _
    $region7: #{tpu_custom_call.1} parent=1 // pred_check_branch
      %22 = sbr.rel (0) target = $region9
    $region8: #{tpu_custom_call.1} parent=1 // pred_region
      %s24 = ssub.s32 256, 256
      %25 = vsyncadd [#allocation6], %s24
      %s26 = sshll.u32 [#allocation5], 4
      %s27 = int_to_ptr.vmem [resolvable:$true] %s26
      %32 = dma.hbm_to_vmem [thread:$0]  %s1, 256, %s27, [#allocation6], 128, 128, 8
    $region9: #{tpu_custom_call.1} parent=1 // pred_fallthru
      _
    // Predicated region
    $region10: #{tpu_custom_call.1} parent=1 // pred_check
      _
    $region11: #{tpu_custom_call.1} parent=1 // pred_check_branch
      %34 = sbr.rel (0) target = $region13
    $region12: #{tpu_custom_call.1} parent=1 // pred_region
      _
    $region13: #{tpu_custom_call.1} parent=1 // pred_fallthru
      _
    // Predicated region
    $region14: #{tpu_custom_call.1} parent=1 // pred_check
      _
    $region15: #{tpu_custom_call.1} parent=1 // pred_check_branch
      %36 = sbr.rel (0) target = $region17
    $region16: #{tpu_custom_call.1} parent=1 // pred_region
      %37 = dma.done [#allocation3], 128
    $region17: #{tpu_custom_call.1} parent=1 // pred_fallthru
      _
    // Predicated region
    $region18: #{tpu_custom_call.1} parent=1 // pred_check
      _
    $region19: #{tpu_custom_call.1} parent=1 // pred_check_branch
      %39 = sbr.rel (0) target = $region21
    $region20: #{tpu_custom_call.1} parent=1 // pred_region
      %40 = dma.done [#allocation6], 256
    $region21: #{tpu_custom_call.1} parent=1 // pred_fallthru
      _
    %v41 = vld [vmem:[#allocation2] sm:$0xff]
    %v42 = vld [vmem:[#allocation5] sm:$0xff]
    %v43 = vld [vmem:[#allocation5 + $0x8] sm:$0xff]
    %v44 = vld [vmem:[%s2] sm:$0x1]
    %v46 = vlaneseq
    %v47 = vshrl.u32 %v46, 7
    %v48 = vsub.s32 0, %v47
    %v49 = vrot.slane %v44, %v48
    %vm51 = vcmask 261120
    %v53 = vsel %vm51, %v41, 0
    %v56 = vsel %vm51, %v42, 0
    %v59 = vsel %vm51, %v43, 0
    %61 = vmatprep.subr.mxu0 0.0
    %62 = vmatpush1.xpose.msra.mxu0 0.0
    %63 = vmatprep.subr.mxu0 0.0
    %64 = vmatpush1.xpose.msra.mxu0 0.0
    %65 = vmatprep.subr.mxu0 0.0
    %66 = vmatpush1.xpose.msra.mxu0 0.0
    %67 = vmatprep.subr.mxu0 0.0
    %68 = vmatpush1.xpose.msra.mxu0 0.0
    %69 = vmatprep.subr.mxu0 0.0
    %70 = vmatpush1.xpose.msra.mxu0 0.0
    %71 = vmatprep.subr.mxu0 0.0
    %72 = vmatpush1.xpose.msra.mxu0 0.0
    %73 = vmatprep.subr.mxu0 0.0
    %74 = vmatpush1.xpose.msra.mxu0 0.0
    %75 = vmatprep.subr.mxu0 0.0
    %76 = vmatpush1.xpose.msra.mxu0 0.0
    %77 = vmatprep.subr.mxu0 0.0
    %78 = vmatpush1.xpose.msra.mxu0 0.0
    %79 = vmatprep.subr.mxu0 0.0
    %80 = vmatpush1.xpose.msra.mxu0 0.0
    %81 = vmatprep.subr.mxu0 0.0
    %82 = vmatpush1.xpose.msra.mxu0 0.0
    %83 = vmatprep.subr.mxu0 0.0
    %84 = vmatpush1.xpose.msra.mxu0 0.0
    %85 = vmatprep.subr.mxu0 0.0
    %86 = vmatpush1.xpose.msra.mxu0 0.0
    %87 = vmatprep.subr.mxu0 0.0
    %88 = vmatpush1.xpose.msra.mxu0 0.0
    %89 = vmatprep.subr.mxu0 0.0
    %90 = vmatpush1.xpose.msra.mxu0 %v59
    %91 = vmatprep.subr.mxu0 0.0
    %92 = vmatpush1.xpose.msra.mxu0 %v56
    %93 = vmatprep.subr.mxu0 0.0
    %94 = vmatpush2.xpose.msra.mxu0 0.0
    %95 = vmatprep.subr.mxu0 0.0
    %96 = vmatpush2.xpose.msra.mxu0 0.0
    %97 = vmatprep.subr.mxu0 0.0
    %98 = vmatpush2.xpose.msra.mxu0 0.0
    %99 = vmatprep.subr.mxu0 0.0
    %100 = vmatpush2.xpose.msra.mxu0 0.0
    %101 = vmatprep.subr.mxu0 0.0
    %102 = vmatpush2.xpose.msra.mxu0 0.0
    %103 = vmatprep.subr.mxu0 0.0
    %104 = vmatpush2.xpose.msra.mxu0 0.0
    %105 = vmatprep.subr.mxu0 0.0
    %106 = vmatpush2.xpose.msra.mxu0 0.0
    %107 = vmatprep.subr.mxu0 0.0
    %108 = vmatpush2.xpose.msra.mxu0 0.0
    %109 = vmatprep.subr.mxu0 0.0
    %110 = vmatpush2.xpose.msra.mxu0 0.0
    %111 = vmatprep.subr.mxu0 0.0
    %112 = vmatpush2.xpose.msra.mxu0 0.0
    %113 = vmatprep.subr.mxu0 0.0
    %114 = vmatpush2.xpose.msra.mxu0 0.0
    %115 = vmatprep.subr.mxu0 0.0
    %116 = vmatpush2.xpose.msra.mxu0 0.0
    %117 = vmatprep.subr.mxu0 0.0
    %118 = vmatpush2.xpose.msra.mxu0 0.0
    %119 = vmatprep.subr.mxu0 0.0
    %120 = vmatpush2.xpose.msra.mxu0 0.0
    %121 = vmatprep.subr.mxu0 0.0
    %122 = vmatpush2.xpose.msra.mxu0 0.0
    %123 = vmatprep.subr.mxu0 0.0
    %124 = vmatpush2.xpose.msra.mxu0 0.0
    %125 = vmatprep.mubr.f32.mxu0 0.0
    %126 = vmatmul.mubr.f32.gmra.mxu0 %v53
    %v127 = vpop.f32.mrf.mxu0
    %v128 = vadd.f32 %v49, %v127
    %v129 = vpop.f32.mrf.mxu0
    %130 = vdwg.mxu0
    %vm131 = vcmask 130048
    %132 = vst.msk [vmem:[#allocation7] sm:$0xff] %vm131, %v128
    // Predicated region
    $region22: #{tpu_custom_call.1} parent=1 // pred_check
      _
    $region23: #{tpu_custom_call.1} parent=1 // pred_check_branch
      %134 = sbr.rel (0) target = $region25
    $region24: #{tpu_custom_call.1} parent=1 // pred_region
      %s136 = ssub.s32 128, 128
      %137 = vsyncadd [#allocation4], %s136
      %s139 = sshll.u32 [#allocation7], 4
      %s140 = int_to_ptr.vmem [resolvable:$true] %s139
      %142 = dma.vmem_to_hbm [thread:$0]  %s140, 128, %s3, [#allocation4]
    $region25: #{tpu_custom_call.1} parent=1 // pred_fallthru
      _
    // Predicated region
    $region26: #{tpu_custom_call.1} parent=1 // pred_check
      _
    $region27: #{tpu_custom_call.1} parent=1 // pred_check_branch
      %144 = sbr.rel (0) target = $region29
    $region28: #{tpu_custom_call.1} parent=1 // pred_region
      %145 = dma.done [#allocation4], 128
    $region29: #{tpu_custom_call.1} parent=1 // pred_fallthru
      _
    %146 = vsyncpa [#allocation3], 1
    %147 = vsyncpa [#allocation6], 1
    %148 = vsyncpa [#allocation4], 1

</llo_original>
